<compile_context>
chip_gen: v5e
topology: v5e:2x2
jax: 0.10.0
libtpu: 0.0.40
codegen_flags: <defaults>
</compile_context>

<pallas_src>
import jax
import jax.numpy as jnp
from jax.experimental import pallas as pl
from jax.experimental.pallas import tpu as pltpu

_MIB = 1024 * 1024


def _round_down(x, m):
    return (x // m) * m


def _tpu_info():
    try:
        return pltpu.get_tpu_info()
    except Exception:
        return None


def _tpu_vmem_capacity_bytes():
    info = _tpu_info()
    if info is not None:
        for name in ("vmem_capacity_bytes", "vmem_size_bytes", "vmem_bytes"):
            v = getattr(info, name, None)
            if v:
                return int(v)
    return 64 * _MIB  # conservative default (v7x physical VMEM per TensorCore)


def _tpu_num_tensorcores():
    info = _tpu_info()
    if info is not None:
        for name in ("num_tensorcores", "tensorcore_count", "num_cores",
                     "cores_per_chip", "core_count"):
            v = getattr(info, name, None)
            if v:
                return int(v)
    return 2  # conservative: assume a multi-TC chip so the batch axis is split


def _choose_tiles(B, S, H, itemsize, use_mask, out_itemsize):
    """Pick (TB, TS, vmem_limit): TB batch rows x TS sequence positions."""
    vmem_cap = _tpu_vmem_capacity_bytes()
    if vmem_cap >= 128 * _MIB:        # v5e / v6e: 128 MiB physical VMEM
        vmem_limit = 64 * _MIB
        tile_budget = 16 * _MIB
    else:                             # v7x: 64 MiB physical VMEM per TC
        vmem_limit = 48 * _MIB
        tile_budget = 12 * _MIB

    SQ = 128  # sequence-tile quantum: keeps the 2-D mask block lane-aligned

    # Sequence tile: full S if 8 batch rows of it fit the budget, otherwise
    # the largest multiple of 128 that does (ragged tail handled in-kernel).
    if 8 * S * H * itemsize <= tile_budget or S <= SQ:
        TS = S
    else:
        TS = max(SQ, _round_down(tile_budget // (8 * H * itemsize), SQ))

    # Batch tile: multiple of 8, or exactly B when B <= 8 (block == full dim).
    if B <= 8:
        TB = B
    else:
        rows = tile_budget // max(1, TS * H * itemsize)
        TB = max(8, _round_down(min(rows, B), 8))
        if _tpu_num_tensorcores() >= 2:
            # Keep >=2 iterations on the "parallel" batch axis so multi-TC
            # chips (v7x) shard it; near-free on single-TC chips.
            TB = min(TB, max(8, _round_down(B // 2, 8)))

    # Hard VMEM feasibility check (review item): double-buffered reps + mask
    # + output block (+ f32 scratch if out is not f32) + weight must fit.
    def vmem_need(tb, ts):
        need = 2 * tb * ts * H * itemsize                  # reps, double-buffered
        if use_mask:
            need += 2 * tb * ts * 4                        # f32 mask, double-buffered
        need += 2 * tb * H * out_itemsize                  # output block
        if out_itemsize != 4:
            need += tb * H * 4                             # f32 accumulator scratch
        need += 2 * H * itemsize                           # weight block
        return need

    margin = 2 * _MIB  # headroom for compiler-internal scratch
    while vmem_need(TB, TS) + margin > vmem_limit:
        if TS > SQ:
            TS = max(SQ, _round_down(TS // 2, SQ))
        elif TB > 8 and B > 8:
            TB = max(8, _round_down(TB // 2, 8))
        else:
            break  # smallest legal tile; raise the scoped limit instead
    vmem_limit = min(max(vmem_limit, vmem_need(TB, TS) + margin),
                     max(vmem_cap - 8 * _MIB, 16 * _MIB))
    return TB, TS, int(vmem_limit)


def _make_kernel(use_mask, use_scratch, S, TS):
    ragged_s = (S % TS) != 0

    def kernel(w_ref, b_ref, reps_ref, *rest):
        rest = list(rest)
        mask_ref = rest.pop(0) if use_mask else None
        out_ref = rest.pop(0)
        acc_ref = rest.pop(0) if use_scratch else out_ref

        k = pl.program_id(1)

        @pl.when(k == 0)
        def _():
            acc_ref[...] = jnp.zeros_like(acc_ref)

        # Upcast to f32 before any reduction (bf16-safe).
        reps = reps_ref[...].astype(jnp.float32)                # (TB, TS, H)
        w = w_ref[...].astype(jnp.float32).reshape((1, 1, -1))  # (1, 1, H)
        bias = b_ref[0, 0]                                      # scalar (SMEM)

        # Linear(H -> 1): VPU broadcast-mul + XLU lane reduction (no MXU).
        # NOTE: could be routed to the idle MXU on v7x if a bundle dump ever
        # shows this kernel compute-bound; it is HBM-bound on v5e/v6e.
        scores = jnp.sum(reps * w, axis=-1) + bias               # (TB, TS)
        if use_mask:
            scores = scores * mask_ref[...].astype(jnp.float32)

        contrib = reps * scores[..., None]                       # (TB, TS, H)
        if ragged_s:
            # Ragged last sequence tile: zero out-of-bounds contributions via
            # jnp.where so garbage/NaN tail data cannot reach the accumulator.
            tb, ts = scores.shape
            s_idx = k * TS + jax.lax.broadcasted_iota(jnp.int32, (tb, ts), 1)
            contrib = jnp.where((s_idx < S)[..., None], contrib, 0.0)

        # Weighted sum over the sequence: VPU mul + sublane reduction,
        # accumulated in the VMEM-resident (TB, H) block.
        acc_ref[...] += jnp.sum(contrib, axis=1).astype(acc_ref.dtype)

        if use_scratch:
            @pl.when(k == pl.num_programs(1) - 1)
            def _():
                out_ref[...] = acc_ref[...].astype(out_ref.dtype)

    return kernel


def softattention_forward(reps, weight, bias, mask=None, *, tb=None, ts=None):
    """reps: (B, S, H), weight: (1, H), bias: (1,), mask: (B, S) or None."""
    B, S, H = reps.shape
    itemsize = jnp.dtype(reps.dtype).itemsize
    out_dtype = reps.dtype
    out_itemsize = jnp.dtype(out_dtype).itemsize
    use_mask = mask is not None
    use_scratch = out_dtype != jnp.float32  # accumulate directly in out if f32

    TB, TS, vmem_limit = _choose_tiles(B, S, H, itemsize, use_mask, out_itemsize)
    if tb is not None:
        TB = tb
    if ts is not None:
        TS = ts

    grid = (pl.cdiv(B, TB), pl.cdiv(S, TS))

    w = weight.reshape(1, H)
    b2d = bias.reshape(1, 1).astype(jnp.float32)

    in_specs = [
        pl.BlockSpec((1, H), lambda i, k: (0, 0)),                  # weight
        pl.BlockSpec(memory_space=pltpu.MemorySpace.SMEM),          # bias
        pl.BlockSpec((TB, TS, H), lambda i, k: (i, k, 0)),          # reps tile
    ]
    args = [w, b2d, reps]
    if use_mask:
        in_specs.append(pl.BlockSpec((TB, TS), lambda i, k: (i, k)))  # mask
        args.append(mask.astype(jnp.float32))

    scratch_shapes = [pltpu.VMEM((TB, H), jnp.float32)] if use_scratch else []

    bytes_accessed = int(reps.size * itemsize
                         + H * itemsize
                         + (B * S * 4 if use_mask else 0)
                         + B * H * out_itemsize)

    out = pl.pallas_call(
        _make_kernel(use_mask, use_scratch, S, TS),
        out_shape=jax.ShapeDtypeStruct((B, H), out_dtype),
        grid=grid,
        in_specs=in_specs,
        out_specs=pl.BlockSpec((TB, H), lambda i, k: (i, 0)),
        scratch_shapes=scratch_shapes,
        compiler_params=pltpu.CompilerParams(
            dimension_semantics=("parallel", "arbitrary"),
            vmem_limit_bytes=vmem_limit),
        cost_estimate=pl.CostEstimate(
            flops=4 * B * S * H,
            transcendentals=0,
            bytes_accessed=bytes_accessed),
    )(*args)
    return out


def _reference(reps, weight, bias, mask=None):
    # Pure-JAX mirror of the PyTorch forward (VPU-only, no MXU precision ambiguity).
    scores = jnp.sum(reps * weight[0][None, None, :], axis=-1) + bias[0]  # (B, S)
    if mask is not None:
        scores = mask * scores
    return jnp.sum(reps * scores[..., None], axis=1)                      # (B, H)


if __name__ == "__main__":
    key = jax.random.PRNGKey(0)
    k_reps, k_mask, k_w, k_b, k_reps2, k_mask2, k_w2, k_b2 = jax.random.split(key, 8)

    # --- Small shapes consistent with the module's softattention block ---
    B, S, H = 2, 8, 32
    reps = jax.random.normal(k_reps, (B, S, H), dtype=jnp.float32)
    mask = (jax.random.uniform(k_mask, (B, S)) > 0.3).astype(jnp.float32)
    # nn.Linear(H, 1) default init: U(-1/sqrt(H), 1/sqrt(H)) for weight & bias.
    bound = 1.0 / (H ** 0.5)
    weight = jax.random.uniform(k_w, (1, H), minval=-bound, maxval=bound,
                                dtype=jnp.float32)
    bias = jax.random.uniform(k_b, (1,), minval=-bound, maxval=bound,
                              dtype=jnp.float32)

    out = jax.block_until_ready(softattention_forward(reps, weight, bias, mask))
    ref = _reference(reps, weight, bias, mask)
    assert out.shape == (B, H)
    assert jnp.allclose(out, ref, atol=1e-5, rtol=1e-5)

    # Specialized mask=None path.
    out_nm = jax.block_until_ready(softattention_forward(reps, weight, bias))
    assert jnp.allclose(out_nm, _reference(reps, weight, bias),
                        atol=1e-5, rtol=1e-5)

    # --- Exercise the no-padding ragged-tile path with forced small tiles ---
    B2, S2, H2 = 10, 300, 128          # ragged along both batch and sequence
    reps2 = jax.random.normal(k_reps2, (B2, S2, H2), dtype=jnp.float32)
    mask2 = (jax.random.uniform(k_mask2, (B2, S2)) > 0.3).astype(jnp.float32)
    bound2 = 1.0 / (H2 ** 0.5)
    weight2 = jax.random.uniform(k_w2, (1, H2), minval=-bound2, maxval=bound2,
                                 dtype=jnp.float32)
    bias2 = jax.random.uniform(k_b2, (1,), minval=-bound2, maxval=bound2,
                               dtype=jnp.float32)

    out2 = jax.block_until_ready(
        softattention_forward(reps2, weight2, bias2, mask2, tb=8, ts=128))
    assert jnp.allclose(out2, _reference(reps2, weight2, bias2, mask2),
                        atol=1e-3, rtol=1e-3)

    out2_nm = jax.block_until_ready(
        softattention_forward(reps2, weight2, bias2, tb=8, ts=128))
    assert jnp.allclose(out2_nm, _reference(reps2, weight2, bias2),
                        atol=1e-3, rtol=1e-3)

    print("KERNEL_OK")
</pallas_src>

<mosaic_0001>
module attributes {stable_mosaic.version = 11 : i64} {
  func.func @kernel(%arg0: i32, %arg1: i32, %arg2: memref<1x32xf32, #tpu.memory_space<vmem>>, %arg3: memref<1x1xf32, #tpu.memory_space<smem>>, %arg4: memref<2x8x32xf32, #tpu.memory_space<vmem>>, %arg5: memref<2x8xf32, #tpu.memory_space<vmem>>, %arg6: memref<2x32xf32, #tpu.memory_space<vmem>>) attributes {dimension_semantics = [#tpu.dimension_semantics<parallel>, #tpu.dimension_semantics<arbitrary>], iteration_bounds = array<i64: 1, 1>, scalar_prefetch = 0 : i64, scratch_operands = 0 : i64, tpu.core_type = #tpu.core_type<tc>, window_params = [{pipeline_mode = #tpu.pipeline_mode<synchronous>, transform_indices = @transform_0, window_bounds = array<i64: 1, 32>}, {transform_indices = @transform_1, window_bounds = array<i64: 1, 1>}, {transform_indices = @transform_2, window_bounds = array<i64: 2, 8, 32>}, {transform_indices = @transform_3, window_bounds = array<i64: 2, 8>}, {transform_indices = @transform_4, window_bounds = array<i64: 2, 32>}]} {
    %c0_i32 = arith.constant 0 : i32
    %0 = arith.cmpi eq, %arg1, %c0_i32 : i32
    %1 = arith.extui %0 : i1 to i32
    %c0_i32_0 = arith.constant 0 : i32
    %2 = arith.cmpi ne, %1, %c0_i32_0 : i32
    scf.if %2 {
      %cst_14 = arith.constant 0.000000e+00 : f32
      %21 = vector.broadcast %cst_14 : f32 to vector<2x32xf32>
      %c0_15 = arith.constant 0 : index
      %c0_16 = arith.constant 0 : index
      %22 = vector.load %arg6[%c0_15, %c0_16] : memref<2x32xf32, #tpu.memory_space<vmem>>, vector<2x32xf32>
      tpu.vector_store %arg6[%c0_15, %c0_16], %21 {strides = array<i32>} : memref<2x32xf32, #tpu.memory_space<vmem>>, vector<2x32xf32>,
    } else {
    }
    %c0 = arith.constant 0 : index
    %c0_1 = arith.constant 0 : index
    %c0_2 = arith.constant 0 : index
    %3 = vector.load %arg4[%c0, %c0_1, %c0_2] : memref<2x8x32xf32, #tpu.memory_space<vmem>>, vector<2x8x32xf32>
    %c0_3 = arith.constant 0 : index
    %c0_4 = arith.constant 0 : index
    %4 = vector.load %arg2[%c0_3, %c0_4] : memref<1x32xf32, #tpu.memory_space<vmem>>, vector<1x32xf32>
    %5 = vector.shape_cast %4 : vector<1x32xf32> to vector<1x1x32xf32>
    %c0_5 = arith.constant 0 : index
    %c0_6 = arith.constant 0 : index
    %6 = memref.load %arg3[%c0_5, %c0_6] : memref<1x1xf32, #tpu.memory_space<smem>>
    %7 = vector.broadcast %5 : vector<1x1x32xf32> to vector<2x8x32xf32>
    %8 = arith.mulf %3, %7 : vector<2x8x32xf32>
    %cst = arith.constant dense<0.000000e+00> : vector<2x8xf32>
    %9 = vector.multi_reduction <add>, %8, %cst [2] : vector<2x8x32xf32> to vector<2x8xf32>
    %10 = vector.broadcast %6 : f32 to vector<2x8xf32>
    %11 = arith.addf %9, %10 : vector<2x8xf32>
    %c0_7 = arith.constant 0 : index
    %c0_8 = arith.constant 0 : index
    %12 = vector.load %arg5[%c0_7, %c0_8] : memref<2x8xf32, #tpu.memory_space<vmem>>, vector<2x8xf32>
    %13 = arith.mulf %11, %12 : vector<2x8xf32>
    %14 = vector.shape_cast %13 : vector<2x8xf32> to vector<2x8x1xf32>
    %15 = vector.broadcast %14 : vector<2x8x1xf32> to vector<2x8x32xf32>
    %16 = arith.mulf %3, %15 : vector<2x8x32xf32>
    %c0_9 = arith.constant 0 : index
    %c0_10 = arith.constant 0 : index
    %17 = vector.load %arg6[%c0_9, %c0_10] : memref<2x32xf32, #tpu.memory_space<vmem>>, vector<2x32xf32>
    %cst_11 = arith.constant dense<0.000000e+00> : vector<2x32xf32>
    %18 = vector.multi_reduction <add>, %16, %cst_11 [1] : vector<2x8x32xf32> to vector<2x32xf32>
    %19 = arith.addf %17, %18 : vector<2x32xf32>
    %c0_12 = arith.constant 0 : index
    %c0_13 = arith.constant 0 : index
    %20 = vector.load %arg6[%c0_12, %c0_13] : memref<2x32xf32, #tpu.memory_space<vmem>>, vector<2x32xf32>
    tpu.vector_store %arg6[%c0_12, %c0_13], %19 {strides = array<i32>} : memref<2x32xf32, #tpu.memory_space<vmem>>, vector<2x32xf32>,
    return
  }
  func.func @transform_0(%arg0: i32, %arg1: i32) -> (i32, i32) {
    %c0_i32 = arith.constant 0 : i32
    %c0_i32_0 = arith.constant 0 : i32
    %c0_i32_1 = arith.constant 0 : i32
    return %c0_i32, %c0_i32_0 : i32, i32
  }
  func.func @transform_1(%arg0: i32, %arg1: i32) -> (i32, i32) {
    %c0_i32 = arith.constant 0 : i32
    %c0_i32_0 = arith.constant 0 : i32
    %c0_i32_1 = arith.constant 0 : i32
    return %c0_i32, %c0_i32_0 : i32, i32
  }
  func.func @transform_2(%arg0: i32, %arg1: i32) -> (i32, i32, i32) {
    %c0_i32 = arith.constant 0 : i32
    %c0_i32_0 = arith.constant 0 : i32
    return %arg0, %arg1, %c0_i32 : i32, i32, i32
  }
  func.func @transform_3(%arg0: i32, %arg1: i32) -> (i32, i32) {
    %c0_i32 = arith.constant 0 : i32
    return %arg0, %arg1 : i32, i32
  }
  func.func @transform_4(%arg0: i32, %arg1: i32) -> (i32, i32) {
    %c0_i32 = arith.constant 0 : i32
    %c0_i32_0 = arith.constant 0 : i32
    return %arg0, %c0_i32 : i32, i32
  }
}

</mosaic_0001>

<llo_original>
// kernel: tpu_custom_call.1
$region0: #{tpu_custom_call.1}
  #allocation0 [shape = 'u32[]', space=smem, size = 0x4, offset = 0x4, fixed_abs, tag = 'smem constant byte address 0x4 - core index']
  #allocation1 [shape = 'u32[72,128]{1,0:T(1,128)}', space=vmem, size = 0x9000, scoped, tag = 'internal scratch']
  #allocation2 [shape = 'f32[1,1]{1,0:T(1,128)S(6)}', space=smem, size = 0x200, scoped, tag = 'scoped memory for tpu_custom_call.1']
  %s0 = inlined_call_operand.vmem [shape: f32[1,32], index: 0, kind: input, shape index: {}]
  %s1 = inlined_call_operand.<no memory space> [shape: f32[1,1], index: 1, kind: input, shape index: {}]
  %s2 = inlined_call_operand.hbm [shape: f32[2,8,32], index: 2, kind: input, shape index: {}]
  %s3 = inlined_call_operand.vmem [shape: f32[2,8], index: 3, kind: input, shape index: {}]
  %s4 = inlined_call_operand.hbm [shape: f32[2,32], index: 4, kind: output, shape index: {}]
  %s5 = sld [smem:[#allocation0]]
  $region34: #{tpu_custom_call.1} parent=0
    _
  %s7 = ssub.s32 1, %s5
  %s8 = scalar_select 0, %s7, %s5
  %9 = sst [smem:[#allocation2]] %s1
  $region1: #{tpu_custom_call.1} parent=0
    #allocation3 [shape = 'u8[8192]{0}', space=vmem, size = 0x2000, scoped, tag = 'input window, operand 2, single buffered']
    #allocation4 [shape = 's32[1]{0}', space=sflag, size = 0x4, scoped, tag = 'scoped memory for tpu_custom_call.1']
    #allocation5 [shape = 's32[1]{0}', space=sflag, size = 0x4, scoped, tag = 'scoped memory for tpu_custom_call.1']
    #allocation6 [shape = 'u8[1024]{0}', space=vmem, size = 0x400, scoped, tag = 'output window, operand 0, single buffered']
    %10 = vsyncpa [#allocation4], 0
    %11 = vsyncpa [#allocation5], 0
    // Predicated region
    $region2: #{tpu_custom_call.1} parent=1 // pred_check
      _
    $region3: #{tpu_custom_call.1} parent=1 // pred_check_branch
      %13 = sbr.rel (0) target = $region5
    $region4: #{tpu_custom_call.1} parent=1 // pred_region
      _
    $region5: #{tpu_custom_call.1} parent=1 // pred_fallthru
      _
    // Predicated region
    $region6: #{tpu_custom_call.1} parent=1 // pred_check
      _
    $region7: #{tpu_custom_call.1} parent=1 // pred_check_branch
      %15 = sbr.rel (0) target = $region9
    $region8: #{tpu_custom_call.1} parent=1 // pred_region
      _
    $region9: #{tpu_custom_call.1} parent=1 // pred_fallthru
      _
    // Predicated region
    $region10: #{tpu_custom_call.1} parent=1 // pred_check
      _
    $region11: #{tpu_custom_call.1} parent=1 // pred_check_branch
      %17 = sbr.rel (0) target = $region13
    $region12: #{tpu_custom_call.1} parent=1 // pred_region
      %19 = vsyncadd [#allocation4], 0
      %s20 = sshll.u32 %s2, 4
      %s21 = int_to_ptr.hbm [resolvable:$true] %s20
      %s22 = sshll.u32 [#allocation3], 4
      %s23 = int_to_ptr.vmem [resolvable:$true] %s22
      %28 = dma.hbm_to_vmem [thread:$0]  %s21, 256, %s23, [#allocation4], 128, 128, 8
    $region13: #{tpu_custom_call.1} parent=1 // pred_fallthru
      _
    // Predicated region
    $region14: #{tpu_custom_call.1} parent=1 // pred_check
      _
    $region15: #{tpu_custom_call.1} parent=1 // pred_check_branch
      %30 = sbr.rel (0) target = $region17
    $region16: #{tpu_custom_call.1} parent=1 // pred_region
      _
    $region17: #{tpu_custom_call.1} parent=1 // pred_fallthru
      _
    // Predicated region
    $region18: #{tpu_custom_call.1} parent=1 // pred_check
      _
    $region19: #{tpu_custom_call.1} parent=1 // pred_check_branch
      %32 = sbr.rel (0) target = $region21
    $region20: #{tpu_custom_call.1} parent=1 // pred_region
      %34 = dma.done [#allocation4], 256
    $region21: #{tpu_custom_call.1} parent=1 // pred_fallthru
      _
    %p35 = scmp.eq.s32.totalorder 0, 0
    // Predicated region
    $region22: #{tpu_custom_call.1} parent=1 // pred_check
      %p36 = pneg %p35
    $region23: #{tpu_custom_call.1} parent=1 // pred_check_branch
      %38 = sbr.rel (%p36) target = $region25
    $region24: #{tpu_custom_call.1} parent=1 // pred_region
      %vm39 = vcmask 254976
      %40 = vst.msk [vmem:[#allocation6] sm:$0x3] %vm39, 0.0
    $region25: #{tpu_custom_call.1} parent=1 // pred_fallthru
      _
    %v41 = vld [vmem:[#allocation3] sm:$0xff]
    %v42 = vld [vmem:[#allocation3 + $0x8] sm:$0xff]
    %v43 = vld [vmem:[%s0] sm:$0x1]
    %s44 = sld [smem:[#allocation2]]
    %v46 = vperm.slane %v43, 0
    %v48 = vmul.f32 %v41, %v46
    %v49 = vmul.f32 %v42, %v46
    %vm50 = vcmask 261120
    %v51 = vsel %vm50, %v48, 0.0
    %52 = vadd.xlane.f32.xlu0 %v51
    %v53 = vpop.xlane.xlu0 %52
    %v54 = vsel %vm50, %v49, 0.0
    %55 = vadd.xlane.f32.xlu0 %v54
    %v56 = vpop.xlane.xlu0 %55
    %v57 = vstv %s44
    %v58 = vadd.f32 %v53, %v57
    %v59 = vadd.f32 %v56, %v57
    %v60 = vld [vmem:[%s3] sm:$0x3]
    %v62 = vperm.slane %v60, 0
    %v63 = vlaneseq
    %v64 = vshrl.u32 %v63, 7
    %66 = vset.pattern.permute.xlu0 %v64
    %67 = vperm.xlu0 %66, %v62
    %v68 = vpop.permute.xlu0 %67
    %v69 = vperm.slane %v60, 1
    %v70 = vlaneseq
    %v71 = vshrl.u32 %v70, 7
    %73 = vset.pattern.permute.xlu0 %v71
    %74 = vperm.xlu0 %73, %v69
    %v75 = vpop.permute.xlu0 %74
    %v78 = vmul.f32 %v58, %v68
    %v79 = vmul.f32 %v59, %v75
    %81 = vset.pattern.permute.xlu0 0
    %82 = vperm.xlu0 %81, %v78
    %v83 = vpop.permute.xlu0 %82
    %86 = vset.pattern.permute.xlu0 0
    %87 = vperm.xlu0 %86, %v79
    %v88 = vpop.permute.xlu0 %87
    %v90 = vmul.f32 %v41, %v83
    %v91 = vmul.f32 %v42, %v88
    %v92 = vld [vmem:[#allocation6] sm:$0x3]
    %v93 = vsel %vm50, %v90, 0.0
    %v94 = vrot.slane %v93, 4
    %v95 = vadd.f32 %v93, %v94
    %v96 = vrot.slane %v95, 2
    %v97 = vadd.f32 %v95, %v96
    %v98 = vrot.slane %v97, 1
    %v99 = vadd.f32 %v97, %v98
    %v100 = vsel %vm50, %v91, 0.0
    %v101 = vrot.slane %v100, 4
    %v102 = vadd.f32 %v100, %v101
    %v103 = vrot.slane %v102, 2
    %v104 = vadd.f32 %v102, %v103
    %v105 = vrot.slane %v104, 1
    %v106 = vadd.f32 %v104, %v105
    %vm109 = vcmask 1041409
    %v110 = vsel %vm109, %v106, %v99
    %v112 = vadd.f32 %v92, %v110
    %vm113 = vcmask 254976
    %114 = vst.msk [vmem:[#allocation6] sm:$0x3] %vm113, %v112
    // Predicated region
    $region26: #{tpu_custom_call.1} parent=1 // pred_check
      _
    $region27: #{tpu_custom_call.1} parent=1 // pred_check_branch
      %116 = sbr.rel (0) target = $region29
    $region28: #{tpu_custom_call.1} parent=1 // pred_region
      %118 = vsyncadd [#allocation5], 0
      %s120 = sshll.u32 [#allocation6], 4
      %s121 = int_to_ptr.vmem [resolvable:$true] %s120
      %s122 = sshll.u32 %s4, 4
      %s123 = int_to_ptr.hbm [resolvable:$true] %s122
      %125 = dma.vmem_to_hbm [thread:$0]  %s121, 32, %s123, [#allocation5]
    $region29: #{tpu_custom_call.1} parent=1 // pred_fallthru
      _
    // Predicated region
    $region30: #{tpu_custom_call.1} parent=1 // pred_check
      _
    $region31: #{tpu_custom_call.1} parent=1 // pred_check_branch
      %127 = sbr.rel (0) target = $region33
    $region32: #{tpu_custom_call.1} parent=1 // pred_region
      %129 = dma.done [#allocation5], 32
    $region33: #{tpu_custom_call.1} parent=1 // pred_fallthru
      _
    %130 = vsyncpa [#allocation4], 1
    %131 = vsyncpa [#allocation5], 1

</llo_original>
